<compile_context>
chip_gen: v7x
topology: tpu7x:2x2x1
jax: 0.10.0
libtpu: 0.0.40
codegen_flags: <defaults>
</compile_context>

<pallas_src>
import jax
import jax.numpy as jnp
from jax.experimental import pallas as pl
from jax.experimental.pallas import tpu as pltpu

C_IN = 5
C_OUT = 1
KSIZE = 5


def conv1d_kernel(x_ref, w_ref, b_ref, o_ref):
    # x_ref: (B, C_IN, L)        f32 in VMEM
    # w_ref: (C_IN * KSIZE,)     f32 in SMEM (flattened; valid because C_OUT==1)
    # b_ref: (C_OUT,)            f32 in SMEM
    # o_ref: (B, L_out)          f32 in VMEM (C_OUT dim squeezed; re-added in wrapper)
    B = x_ref.shape[0]
    L = x_ref.shape[2]
    L_out = L - KSIZE + 1

    x = x_ref[...]  # one load of the whole (tiny) input tile

    # C_IN independent accumulators -> the 4 VALU slots can overlap instead of
    # serializing on a single 25-long dependent add chain.
    accs = [jnp.zeros((B, L_out), dtype=jnp.float32) for _ in range(C_IN)]

    for k in range(KSIZE):
        # Hoist the unaligned lane shift out of the channel loop: one last-dim
        # slice per k (5 total), then cheap sublane channel extracts inside.
        x_k = x[:, :, k:k + L_out]          # (B, C_IN, L_out)
        for c in range(C_IN):
            accs[c] = accs[c] + x_k[:, c, :] * w_ref[c * KSIZE + k]

    # Tree-sum the independent accumulators, add the bias once (SMEM scalar).
    acc = (accs[0] + accs[1]) + (accs[2] + accs[3]) + accs[4]
    o_ref[...] = (acc + b_ref[0]).astype(o_ref.dtype)


def conv1d_pallas(x, weight, bias):
    """x: (B, C_IN, L) f32; weight: (C_OUT, C_IN, K) f32; bias: (C_OUT,) f32."""
    B, C, L = x.shape
    assert C == C_IN, f"expected {C_IN} input channels, got {C}"
    assert weight.shape == (C_OUT, C_IN, KSIZE) and C_OUT == 1, (
        "kernel is specialized for out_channels == 1")
    assert bias.shape == (C_OUT,)
    L_out = L - KSIZE + 1

    w_flat = weight.reshape(C_IN * KSIZE).astype(jnp.float32)
    b_flat = bias.reshape(C_OUT).astype(jnp.float32)

    # No grid: single invocation, whole arrays placed directly in VMEM/SMEM —
    # avoids pipeline prologue/epilogue overhead at this toy size.
    out2d = pl.pallas_call(
        conv1d_kernel,
        out_shape=jax.ShapeDtypeStruct((B, L_out), x.dtype),
        in_specs=[
            pl.BlockSpec(memory_space=pltpu.MemorySpace.VMEM),   # x
            pl.BlockSpec(memory_space=pltpu.MemorySpace.SMEM),   # weight (25 scalars)
            pl.BlockSpec(memory_space=pltpu.MemorySpace.SMEM),   # bias (1 scalar)
        ],
        out_specs=pl.BlockSpec(memory_space=pltpu.MemorySpace.VMEM),
    )(x, w_flat, b_flat)

    # Re-insert the C_OUT=1 channel dim to match PyTorch's (B, C_OUT, L_out).
    return out2d[:, None, :]
    # TODO(synk): for realistic (large B / L) sizes, tile L_out lane-dense in
    # multiples of 128 with a KSIZE-1 input halo, pack up to 8 batch rows per
    # sublane tile, mark the B/L_out grid axis "parallel" (2 TCs on v7x), size
    # tiles for v6e/v5e scoped VMEM vs. v7x's 64 MiB, and raise
    # vmem_limit_bytes via pltpu.CompilerParams if double-buffering overshoots.


def test_model_forward(x, weight, bias):
    """Mirrors TestModel.forward: conv1d, then print the conv output's shape."""
    y = conv1d_pallas(x, weight, bias)
    print(y.shape)  # PyTorch prints x.shape *after* x = conv1(x), i.e. this shape
    return y


if __name__ == "__main__":
    key = jax.random.PRNGKey(0)
    kx, kw, kb = jax.random.split(key, 3)

    # Small shapes consistent with Conv1d(5, 1, kernel_size=5): (B, C_in, L)
    B, L = 2, 16
    x = jax.random.normal(kx, (B, C_IN, L), dtype=jnp.float32)

    # Deterministic parameter init (Kaiming-uniform-like bounds as in PyTorch).
    fan_in = C_IN * KSIZE
    bound = 1.0 / jnp.sqrt(fan_in)
    weight = jax.random.uniform(
        kw, (C_OUT, C_IN, KSIZE), minval=-bound, maxval=bound,
        dtype=jnp.float32)
    bias = jax.random.uniform(
        kb, (C_OUT,), minval=-bound, maxval=bound, dtype=jnp.float32)

    out = test_model_forward(x, weight, bias)
    jax.block_until_ready(out)

    # Reference check with plain JAX (valid 1-D correlation, same as nn.Conv1d).
    ref = jax.lax.conv_general_dilated(
        x, weight, window_strides=(1,), padding="VALID",
        dimension_numbers=("NCH", "OIH", "NCH")) + bias[None, :, None]
    assert out.shape == (B, C_OUT, L - KSIZE + 1)
    assert jnp.allclose(out, ref, atol=1e-5, rtol=1e-5)

    print("KERNEL_OK")
</pallas_src>

<mosaic_0001>
module attributes {stable_mosaic.version = 11 : i64} {
  func.func @conv1d_kernel(%arg0: memref<2x5x16xf32, #tpu.memory_space<vmem>>, %arg1: memref<25xf32, #tpu.memory_space<smem>>, %arg2: memref<1xf32, #tpu.memory_space<smem>>, %arg3: memref<2x12xf32, #tpu.memory_space<vmem>>) attributes {dimension_semantics = [], scalar_prefetch = 0 : i64, scratch_operands = 0 : i64, tpu.core_type = #tpu.core_type<tc>} {
    %c0 = arith.constant 0 : index
    %c0_0 = arith.constant 0 : index
    %c0_1 = arith.constant 0 : index
    %0 = vector.load %arg0[%c0, %c0_0, %c0_1] : memref<2x5x16xf32, #tpu.memory_space<vmem>>, vector<2x5x16xf32>
    %cst = arith.constant 0.000000e+00 : f32
    %1 = vector.broadcast %cst : f32 to vector<2x12xf32>
    %cst_2 = arith.constant 0.000000e+00 : f32
    %2 = vector.broadcast %cst_2 : f32 to vector<2x12xf32>
    %cst_3 = arith.constant 0.000000e+00 : f32
    %3 = vector.broadcast %cst_3 : f32 to vector<2x12xf32>
    %cst_4 = arith.constant 0.000000e+00 : f32
    %4 = vector.broadcast %cst_4 : f32 to vector<2x12xf32>
    %cst_5 = arith.constant 0.000000e+00 : f32
    %5 = vector.broadcast %cst_5 : f32 to vector<2x12xf32>
    %6 = vector.extract_strided_slice %0 {offsets = [0, 0, 0], sizes = [2, 5, 12], strides = [1, 1, 1]} : vector<2x5x16xf32> to vector<2x5x12xf32>
    %7 = vector.extract_strided_slice %6 {offsets = [0, 0, 0], sizes = [2, 1, 12], strides = [1, 1, 1]} : vector<2x5x12xf32> to vector<2x1x12xf32>
    %8 = vector.shape_cast %7 : vector<2x1x12xf32> to vector<2x12xf32>
    %c0_6 = arith.constant 0 : index
    %9 = memref.load %arg1[%c0_6] : memref<25xf32, #tpu.memory_space<smem>>
    %10 = vector.broadcast %9 : f32 to vector<2x12xf32>
    %11 = arith.mulf %8, %10 : vector<2x12xf32>
    %12 = arith.addf %1, %11 : vector<2x12xf32>
    %13 = vector.extract_strided_slice %6 {offsets = [0, 1, 0], sizes = [2, 1, 12], strides = [1, 1, 1]} : vector<2x5x12xf32> to vector<2x1x12xf32>
    %14 = vector.shape_cast %13 : vector<2x1x12xf32> to vector<2x12xf32>
    %c5 = arith.constant 5 : index
    %15 = memref.load %arg1[%c5] : memref<25xf32, #tpu.memory_space<smem>>
    %16 = vector.broadcast %15 : f32 to vector<2x12xf32>
    %17 = arith.mulf %14, %16 : vector<2x12xf32>
    %18 = arith.addf %2, %17 : vector<2x12xf32>
    %19 = vector.extract_strided_slice %6 {offsets = [0, 2, 0], sizes = [2, 1, 12], strides = [1, 1, 1]} : vector<2x5x12xf32> to vector<2x1x12xf32>
    %20 = vector.shape_cast %19 : vector<2x1x12xf32> to vector<2x12xf32>
    %c10 = arith.constant 10 : index
    %21 = memref.load %arg1[%c10] : memref<25xf32, #tpu.memory_space<smem>>
    %22 = vector.broadcast %21 : f32 to vector<2x12xf32>
    %23 = arith.mulf %20, %22 : vector<2x12xf32>
    %24 = arith.addf %3, %23 : vector<2x12xf32>
    %25 = vector.extract_strided_slice %6 {offsets = [0, 3, 0], sizes = [2, 1, 12], strides = [1, 1, 1]} : vector<2x5x12xf32> to vector<2x1x12xf32>
    %26 = vector.shape_cast %25 : vector<2x1x12xf32> to vector<2x12xf32>
    %c15 = arith.constant 15 : index
    %27 = memref.load %arg1[%c15] : memref<25xf32, #tpu.memory_space<smem>>
    %28 = vector.broadcast %27 : f32 to vector<2x12xf32>
    %29 = arith.mulf %26, %28 : vector<2x12xf32>
    %30 = arith.addf %4, %29 : vector<2x12xf32>
    %31 = vector.extract_strided_slice %6 {offsets = [0, 4, 0], sizes = [2, 1, 12], strides = [1, 1, 1]} : vector<2x5x12xf32> to vector<2x1x12xf32>
    %32 = vector.shape_cast %31 : vector<2x1x12xf32> to vector<2x12xf32>
    %c20 = arith.constant 20 : index
    %33 = memref.load %arg1[%c20] : memref<25xf32, #tpu.memory_space<smem>>
    %34 = vector.broadcast %33 : f32 to vector<2x12xf32>
    %35 = arith.mulf %32, %34 : vector<2x12xf32>
    %36 = arith.addf %5, %35 : vector<2x12xf32>
    %37 = vector.extract_strided_slice %0 {offsets = [0, 0, 1], sizes = [2, 5, 12], strides = [1, 1, 1]} : vector<2x5x16xf32> to vector<2x5x12xf32>
    %38 = vector.extract_strided_slice %37 {offsets = [0, 0, 0], sizes = [2, 1, 12], strides = [1, 1, 1]} : vector<2x5x12xf32> to vector<2x1x12xf32>
    %39 = vector.shape_cast %38 : vector<2x1x12xf32> to vector<2x12xf32>
    %c1 = arith.constant 1 : index
    %40 = memref.load %arg1[%c1] : memref<25xf32, #tpu.memory_space<smem>>
    %41 = vector.broadcast %40 : f32 to vector<2x12xf32>
    %42 = arith.mulf %39, %41 : vector<2x12xf32>
    %43 = arith.addf %12, %42 : vector<2x12xf32>
    %44 = vector.extract_strided_slice %37 {offsets = [0, 1, 0], sizes = [2, 1, 12], strides = [1, 1, 1]} : vector<2x5x12xf32> to vector<2x1x12xf32>
    %45 = vector.shape_cast %44 : vector<2x1x12xf32> to vector<2x12xf32>
    %c6 = arith.constant 6 : index
    %46 = memref.load %arg1[%c6] : memref<25xf32, #tpu.memory_space<smem>>
    %47 = vector.broadcast %46 : f32 to vector<2x12xf32>
    %48 = arith.mulf %45, %47 : vector<2x12xf32>
    %49 = arith.addf %18, %48 : vector<2x12xf32>
    %50 = vector.extract_strided_slice %37 {offsets = [0, 2, 0], sizes = [2, 1, 12], strides = [1, 1, 1]} : vector<2x5x12xf32> to vector<2x1x12xf32>
    %51 = vector.shape_cast %50 : vector<2x1x12xf32> to vector<2x12xf32>
    %c11 = arith.constant 11 : index
    %52 = memref.load %arg1[%c11] : memref<25xf32, #tpu.memory_space<smem>>
    %53 = vector.broadcast %52 : f32 to vector<2x12xf32>
    %54 = arith.mulf %51, %53 : vector<2x12xf32>
    %55 = arith.addf %24, %54 : vector<2x12xf32>
    %56 = vector.extract_strided_slice %37 {offsets = [0, 3, 0], sizes = [2, 1, 12], strides = [1, 1, 1]} : vector<2x5x12xf32> to vector<2x1x12xf32>
    %57 = vector.shape_cast %56 : vector<2x1x12xf32> to vector<2x12xf32>
    %c16 = arith.constant 16 : index
    %58 = memref.load %arg1[%c16] : memref<25xf32, #tpu.memory_space<smem>>
    %59 = vector.broadcast %58 : f32 to vector<2x12xf32>
    %60 = arith.mulf %57, %59 : vector<2x12xf32>
    %61 = arith.addf %30, %60 : vector<2x12xf32>
    %62 = vector.extract_strided_slice %37 {offsets = [0, 4, 0], sizes = [2, 1, 12], strides = [1, 1, 1]} : vector<2x5x12xf32> to vector<2x1x12xf32>
    %63 = vector.shape_cast %62 : vector<2x1x12xf32> to vector<2x12xf32>
    %c21 = arith.constant 21 : index
    %64 = memref.load %arg1[%c21] : memref<25xf32, #tpu.memory_space<smem>>
    %65 = vector.broadcast %64 : f32 to vector<2x12xf32>
    %66 = arith.mulf %63, %65 : vector<2x12xf32>
    %67 = arith.addf %36, %66 : vector<2x12xf32>
    %68 = vector.extract_strided_slice %0 {offsets = [0, 0, 2], sizes = [2, 5, 12], strides = [1, 1, 1]} : vector<2x5x16xf32> to vector<2x5x12xf32>
    %69 = vector.extract_strided_slice %68 {offsets = [0, 0, 0], sizes = [2, 1, 12], strides = [1, 1, 1]} : vector<2x5x12xf32> to vector<2x1x12xf32>
    %70 = vector.shape_cast %69 : vector<2x1x12xf32> to vector<2x12xf32>
    %c2 = arith.constant 2 : index
    %71 = memref.load %arg1[%c2] : memref<25xf32, #tpu.memory_space<smem>>
    %72 = vector.broadcast %71 : f32 to vector<2x12xf32>
    %73 = arith.mulf %70, %72 : vector<2x12xf32>
    %74 = arith.addf %43, %73 : vector<2x12xf32>
    %75 = vector.extract_strided_slice %68 {offsets = [0, 1, 0], sizes = [2, 1, 12], strides = [1, 1, 1]} : vector<2x5x12xf32> to vector<2x1x12xf32>
    %76 = vector.shape_cast %75 : vector<2x1x12xf32> to vector<2x12xf32>
    %c7 = arith.constant 7 : index
    %77 = memref.load %arg1[%c7] : memref<25xf32, #tpu.memory_space<smem>>
    %78 = vector.broadcast %77 : f32 to vector<2x12xf32>
    %79 = arith.mulf %76, %78 : vector<2x12xf32>
    %80 = arith.addf %49, %79 : vector<2x12xf32>
    %81 = vector.extract_strided_slice %68 {offsets = [0, 2, 0], sizes = [2, 1, 12], strides = [1, 1, 1]} : vector<2x5x12xf32> to vector<2x1x12xf32>
    %82 = vector.shape_cast %81 : vector<2x1x12xf32> to vector<2x12xf32>
    %c12 = arith.constant 12 : index
    %83 = memref.load %arg1[%c12] : memref<25xf32, #tpu.memory_space<smem>>
    %84 = vector.broadcast %83 : f32 to vector<2x12xf32>
    %85 = arith.mulf %82, %84 : vector<2x12xf32>
    %86 = arith.addf %55, %85 : vector<2x12xf32>
    %87 = vector.extract_strided_slice %68 {offsets = [0, 3, 0], sizes = [2, 1, 12], strides = [1, 1, 1]} : vector<2x5x12xf32> to vector<2x1x12xf32>
    %88 = vector.shape_cast %87 : vector<2x1x12xf32> to vector<2x12xf32>
    %c17 = arith.constant 17 : index
    %89 = memref.load %arg1[%c17] : memref<25xf32, #tpu.memory_space<smem>>
    %90 = vector.broadcast %89 : f32 to vector<2x12xf32>
    %91 = arith.mulf %88, %90 : vector<2x12xf32>
    %92 = arith.addf %61, %91 : vector<2x12xf32>
    %93 = vector.extract_strided_slice %68 {offsets = [0, 4, 0], sizes = [2, 1, 12], strides = [1, 1, 1]} : vector<2x5x12xf32> to vector<2x1x12xf32>
    %94 = vector.shape_cast %93 : vector<2x1x12xf32> to vector<2x12xf32>
    %c22 = arith.constant 22 : index
    %95 = memref.load %arg1[%c22] : memref<25xf32, #tpu.memory_space<smem>>
    %96 = vector.broadcast %95 : f32 to vector<2x12xf32>
    %97 = arith.mulf %94, %96 : vector<2x12xf32>
    %98 = arith.addf %67, %97 : vector<2x12xf32>
    %99 = vector.extract_strided_slice %0 {offsets = [0, 0, 3], sizes = [2, 5, 12], strides = [1, 1, 1]} : vector<2x5x16xf32> to vector<2x5x12xf32>
    %100 = vector.extract_strided_slice %99 {offsets = [0, 0, 0], sizes = [2, 1, 12], strides = [1, 1, 1]} : vector<2x5x12xf32> to vector<2x1x12xf32>
    %101 = vector.shape_cast %100 : vector<2x1x12xf32> to vector<2x12xf32>
    %c3 = arith.constant 3 : index
    %102 = memref.load %arg1[%c3] : memref<25xf32, #tpu.memory_space<smem>>
    %103 = vector.broadcast %102 : f32 to vector<2x12xf32>
    %104 = arith.mulf %101, %103 : vector<2x12xf32>
    %105 = arith.addf %74, %104 : vector<2x12xf32>
    %106 = vector.extract_strided_slice %99 {offsets = [0, 1, 0], sizes = [2, 1, 12], strides = [1, 1, 1]} : vector<2x5x12xf32> to vector<2x1x12xf32>
    %107 = vector.shape_cast %106 : vector<2x1x12xf32> to vector<2x12xf32>
    %c8 = arith.constant 8 : index
    %108 = memref.load %arg1[%c8] : memref<25xf32, #tpu.memory_space<smem>>
    %109 = vector.broadcast %108 : f32 to vector<2x12xf32>
    %110 = arith.mulf %107, %109 : vector<2x12xf32>
    %111 = arith.addf %80, %110 : vector<2x12xf32>
    %112 = vector.extract_strided_slice %99 {offsets = [0, 2, 0], sizes = [2, 1, 12], strides = [1, 1, 1]} : vector<2x5x12xf32> to vector<2x1x12xf32>
    %113 = vector.shape_cast %112 : vector<2x1x12xf32> to vector<2x12xf32>
    %c13 = arith.constant 13 : index
    %114 = memref.load %arg1[%c13] : memref<25xf32, #tpu.memory_space<smem>>
    %115 = vector.broadcast %114 : f32 to vector<2x12xf32>
    %116 = arith.mulf %113, %115 : vector<2x12xf32>
    %117 = arith.addf %86, %116 : vector<2x12xf32>
    %118 = vector.extract_strided_slice %99 {offsets = [0, 3, 0], sizes = [2, 1, 12], strides = [1, 1, 1]} : vector<2x5x12xf32> to vector<2x1x12xf32>
    %119 = vector.shape_cast %118 : vector<2x1x12xf32> to vector<2x12xf32>
    %c18 = arith.constant 18 : index
    %120 = memref.load %arg1[%c18] : memref<25xf32, #tpu.memory_space<smem>>
    %121 = vector.broadcast %120 : f32 to vector<2x12xf32>
    %122 = arith.mulf %119, %121 : vector<2x12xf32>
    %123 = arith.addf %92, %122 : vector<2x12xf32>
    %124 = vector.extract_strided_slice %99 {offsets = [0, 4, 0], sizes = [2, 1, 12], strides = [1, 1, 1]} : vector<2x5x12xf32> to vector<2x1x12xf32>
    %125 = vector.shape_cast %124 : vector<2x1x12xf32> to vector<2x12xf32>
    %c23 = arith.constant 23 : index
    %126 = memref.load %arg1[%c23] : memref<25xf32, #tpu.memory_space<smem>>
    %127 = vector.broadcast %126 : f32 to vector<2x12xf32>
    %128 = arith.mulf %125, %127 : vector<2x12xf32>
    %129 = arith.addf %98, %128 : vector<2x12xf32>
    %130 = vector.extract_strided_slice %0 {offsets = [0, 0, 4], sizes = [2, 5, 12], strides = [1, 1, 1]} : vector<2x5x16xf32> to vector<2x5x12xf32>
    %131 = vector.extract_strided_slice %130 {offsets = [0, 0, 0], sizes = [2, 1, 12], strides = [1, 1, 1]} : vector<2x5x12xf32> to vector<2x1x12xf32>
    %132 = vector.shape_cast %131 : vector<2x1x12xf32> to vector<2x12xf32>
    %c4 = arith.constant 4 : index
    %133 = memref.load %arg1[%c4] : memref<25xf32, #tpu.memory_space<smem>>
    %134 = vector.broadcast %133 : f32 to vector<2x12xf32>
    %135 = arith.mulf %132, %134 : vector<2x12xf32>
    %136 = arith.addf %105, %135 : vector<2x12xf32>
    %137 = vector.extract_strided_slice %130 {offsets = [0, 1, 0], sizes = [2, 1, 12], strides = [1, 1, 1]} : vector<2x5x12xf32> to vector<2x1x12xf32>
    %138 = vector.shape_cast %137 : vector<2x1x12xf32> to vector<2x12xf32>
    %c9 = arith.constant 9 : index
    %139 = memref.load %arg1[%c9] : memref<25xf32, #tpu.memory_space<smem>>
    %140 = vector.broadcast %139 : f32 to vector<2x12xf32>
    %141 = arith.mulf %138, %140 : vector<2x12xf32>
    %142 = arith.addf %111, %141 : vector<2x12xf32>
    %143 = vector.extract_strided_slice %130 {offsets = [0, 2, 0], sizes = [2, 1, 12], strides = [1, 1, 1]} : vector<2x5x12xf32> to vector<2x1x12xf32>
    %144 = vector.shape_cast %143 : vector<2x1x12xf32> to vector<2x12xf32>
    %c14 = arith.constant 14 : index
    %145 = memref.load %arg1[%c14] : memref<25xf32, #tpu.memory_space<smem>>
    %146 = vector.broadcast %145 : f32 to vector<2x12xf32>
    %147 = arith.mulf %144, %146 : vector<2x12xf32>
    %148 = arith.addf %117, %147 : vector<2x12xf32>
    %149 = vector.extract_strided_slice %130 {offsets = [0, 3, 0], sizes = [2, 1, 12], strides = [1, 1, 1]} : vector<2x5x12xf32> to vector<2x1x12xf32>
    %150 = vector.shape_cast %149 : vector<2x1x12xf32> to vector<2x12xf32>
    %c19 = arith.constant 19 : index
    %151 = memref.load %arg1[%c19] : memref<25xf32, #tpu.memory_space<smem>>
    %152 = vector.broadcast %151 : f32 to vector<2x12xf32>
    %153 = arith.mulf %150, %152 : vector<2x12xf32>
    %154 = arith.addf %123, %153 : vector<2x12xf32>
    %155 = vector.extract_strided_slice %130 {offsets = [0, 4, 0], sizes = [2, 1, 12], strides = [1, 1, 1]} : vector<2x5x12xf32> to vector<2x1x12xf32>
    %156 = vector.shape_cast %155 : vector<2x1x12xf32> to vector<2x12xf32>
    %c24 = arith.constant 24 : index
    %157 = memref.load %arg1[%c24] : memref<25xf32, #tpu.memory_space<smem>>
    %158 = vector.broadcast %157 : f32 to vector<2x12xf32>
    %159 = arith.mulf %156, %158 : vector<2x12xf32>
    %160 = arith.addf %129, %159 : vector<2x12xf32>
    %161 = arith.addf %136, %142 : vector<2x12xf32>
    %162 = arith.addf %148, %154 : vector<2x12xf32>
    %163 = arith.addf %161, %162 : vector<2x12xf32>
    %164 = arith.addf %163, %160 : vector<2x12xf32>
    %c0_7 = arith.constant 0 : index
    %165 = memref.load %arg2[%c0_7] : memref<1xf32, #tpu.memory_space<smem>>
    %166 = vector.broadcast %165 : f32 to vector<2x12xf32>
    %167 = arith.addf %164, %166 : vector<2x12xf32>
    %c0_8 = arith.constant 0 : index
    %c0_9 = arith.constant 0 : index
    %168 = vector.load %arg3[%c0_8, %c0_9] : memref<2x12xf32, #tpu.memory_space<vmem>>, vector<2x12xf32>
    tpu.vector_store %arg3[%c0_8, %c0_9], %167 {strides = array<i32>} : memref<2x12xf32, #tpu.memory_space<vmem>>, vector<2x12xf32>,
    return
  }
}

</mosaic_0001>

<llo_original>
// kernel: tpu_custom_call.1
$region0: #{tpu_custom_call.1}
  #allocation0 [shape = 'u32[]', space=smem, size = 0x4, offset = 0x4, fixed_abs, tag = 'smem constant byte address 0x4 - core index']
  #allocation1 [shape = 'u32[144,128]{1,0:T(1,128)}', space=vmem, size = 0x12000, scoped, tag = 'internal scratch']
  #allocation2 [shape = 'f32[1]{0:T(128)S(6)}', space=smem, size = 0x200, scoped, tag = 'scoped memory for tpu_custom_call.1']
  %s0 = inlined_call_operand.vmem [shape: f32[2,5,16], index: 0, kind: input, shape index: {}]
  %s1 = inlined_call_operand.vmem [shape: f32[25], index: 1, kind: input, shape index: {}]
  %s2 = inlined_call_operand.<no memory space> [shape: f32[1], index: 2, kind: input, shape index: {}]
  %s3 = inlined_call_operand.hbm [shape: f32[2,12], index: 3, kind: output, shape index: {}]
  %s4 = sld [smem:[#allocation0]]
  $region26: #{tpu_custom_call.1} parent=0
    _
  %s6 = ssub.s32 1, %s4
  %s7 = scalar_select 0, %s6, %s4
  %8 = sst [smem:[#allocation2]] %s2
  $region1: #{tpu_custom_call.1} parent=0
    #allocation3 [shape = 'u8[512]{0}', space=smem, size = 0x200, scoped, tag = 'input window, operand 1, single buffered']
    #allocation4 [shape = 's32[1]{0}', space=sflag, size = 0x4, scoped, tag = 'scoped memory for tpu_custom_call.1']
    #allocation5 [shape = 's32[1]{0}', space=sflag, size = 0x4, scoped, tag = 'scoped memory for tpu_custom_call.1']
    #allocation6 [shape = 'u8[1024]{0}', space=vmem, size = 0x400, scoped, tag = 'output window, operand 0, single buffered']
    %9 = vsyncpa [#allocation5], 0
    %10 = vsyncpa [#allocation4], 0
    // Predicated region
    $region2: #{tpu_custom_call.1} parent=1 // pred_check
      _
    $region3: #{tpu_custom_call.1} parent=1 // pred_check_branch
      %12 = sbr.rel (0) target = $region5
    $region4: #{tpu_custom_call.1} parent=1 // pred_region
      _
    $region5: #{tpu_custom_call.1} parent=1 // pred_fallthru
      _
    // Predicated region
    $region6: #{tpu_custom_call.1} parent=1 // pred_check
      _
    $region7: #{tpu_custom_call.1} parent=1 // pred_check_branch
      %14 = sbr.rel (0) target = $region9
    $region8: #{tpu_custom_call.1} parent=1 // pred_region
      %s16 = ssub.s32 16, 16
      %17 = vsyncadd [#allocation5], %s16
      %s19 = sshll.u32 %s1, 4
      %s20 = int_to_ptr.vmem [resolvable:$true] %s19
      %22 = dma.vmem_to_smem %s20, 16, [#allocation3], [#allocation5]
    $region9: #{tpu_custom_call.1} parent=1 // pred_fallthru
      _
    // Predicated region
    $region10: #{tpu_custom_call.1} parent=1 // pred_check
      _
    $region11: #{tpu_custom_call.1} parent=1 // pred_check_branch
      %24 = sbr.rel (0) target = $region13
    $region12: #{tpu_custom_call.1} parent=1 // pred_region
      _
    $region13: #{tpu_custom_call.1} parent=1 // pred_fallthru
      _
    // Predicated region
    $region14: #{tpu_custom_call.1} parent=1 // pred_check
      _
    $region15: #{tpu_custom_call.1} parent=1 // pred_check_branch
      %26 = sbr.rel (0) target = $region17
    $region16: #{tpu_custom_call.1} parent=1 // pred_region
      %27 = dma.done [#allocation5], 16
    $region17: #{tpu_custom_call.1} parent=1 // pred_fallthru
      _
    %28 = sfence
    %v29 = vld [vmem:[%s0] sm:$0x1f]
    %v30 = vld [vmem:[%s0 + $0x8] sm:$0x1f]
    %s31 = sld [smem:[#allocation3]]
    %v32 = vstv %s31
    %v33 = vmul.f32 %v29, %v32
    %v34 = vmul.f32 %v30, %v32
    %v35 = vadd.f32 %v33, 0.0
    %v36 = vadd.f32 %v34, 0.0
    %s37 = sld [smem:[#allocation3 + $0x5]]
    %v38 = vstv %s37
    %v39 = vmul.f32 %v29, %v38
    %v40 = vmul.f32 %v30, %v38
    %v41 = vadd.f32 %v39, 0.0
    %v42 = vadd.f32 %v40, 0.0
    %s43 = sld [smem:[#allocation3 + $0xa]]
    %v44 = vstv %s43
    %v45 = vmul.f32 %v29, %v44
    %v46 = vmul.f32 %v30, %v44
    %v47 = vadd.f32 %v45, 0.0
    %v48 = vadd.f32 %v46, 0.0
    %s49 = sld [smem:[#allocation3 + $0xf]]
    %v50 = vstv %s49
    %v51 = vmul.f32 %v29, %v50
    %v52 = vmul.f32 %v30, %v50
    %v53 = vadd.f32 %v51, 0.0
    %v54 = vadd.f32 %v52, 0.0
    %s55 = sld [smem:[#allocation3 + $0x14]]
    %v56 = vstv %s55
    %v57 = vmul.f32 %v29, %v56
    %v58 = vmul.f32 %v30, %v56
    %v59 = vadd.f32 %v57, 0.0
    %v60 = vadd.f32 %v58, 0.0
    %s61 = sld [smem:[#allocation3 + $0x1]]
    %v62 = vstv %s61
    %v63 = vmul.f32 %v29, %v62
    %v64 = vmul.f32 %v30, %v62
    %67 = vrot.lane.b32.xlu0 %v63, 127
    %v68 = vpop.permute.xlu0 %67
    %69 = vrot.lane.b32.xlu0 %v64, 127
    %v70 = vpop.permute.xlu0 %69
    %v73 = vadd.f32 %v35, %v68
    %v74 = vadd.f32 %v36, %v70
    %s75 = sld [smem:[#allocation3 + $0x6]]
    %v76 = vstv %s75
    %v77 = vmul.f32 %v29, %v76
    %v78 = vmul.f32 %v30, %v76
    %81 = vrot.lane.b32.xlu0 %v77, 127
    %v82 = vpop.permute.xlu0 %81
    %83 = vrot.lane.b32.xlu0 %v78, 127
    %v84 = vpop.permute.xlu0 %83
    %v87 = vadd.f32 %v41, %v82
    %v88 = vadd.f32 %v42, %v84
    %s89 = sld [smem:[#allocation3 + $0xb]]
    %v90 = vstv %s89
    %v91 = vmul.f32 %v29, %v90
    %v92 = vmul.f32 %v30, %v90
    %95 = vrot.lane.b32.xlu0 %v91, 127
    %v96 = vpop.permute.xlu0 %95
    %97 = vrot.lane.b32.xlu0 %v92, 127
    %v98 = vpop.permute.xlu0 %97
    %v101 = vadd.f32 %v47, %v96
    %v102 = vadd.f32 %v48, %v98
    %s103 = sld [smem:[#allocation3 + $0x10]]
    %v104 = vstv %s103
    %v105 = vmul.f32 %v29, %v104
    %v106 = vmul.f32 %v30, %v104
    %109 = vrot.lane.b32.xlu0 %v105, 127
    %v110 = vpop.permute.xlu0 %109
    %111 = vrot.lane.b32.xlu0 %v106, 127
    %v112 = vpop.permute.xlu0 %111
    %v115 = vadd.f32 %v53, %v110
    %v116 = vadd.f32 %v54, %v112
    %s117 = sld [smem:[#allocation3 + $0x15]]
    %v118 = vstv %s117
    %v119 = vmul.f32 %v29, %v118
    %v120 = vmul.f32 %v30, %v118
    %123 = vrot.lane.b32.xlu0 %v119, 127
    %v124 = vpop.permute.xlu0 %123
    %125 = vrot.lane.b32.xlu0 %v120, 127
    %v126 = vpop.permute.xlu0 %125
    %v129 = vadd.f32 %v59, %v124
    %v130 = vadd.f32 %v60, %v126
    %s131 = sld [smem:[#allocation3 + $0x2]]
    %v132 = vstv %s131
    %v133 = vmul.f32 %v29, %v132
    %v134 = vmul.f32 %v30, %v132
    %137 = vrot.lane.b32.xlu0 %v133, 126
    %v138 = vpop.permute.xlu0 %137
    %139 = vrot.lane.b32.xlu0 %v134, 126
    %v140 = vpop.permute.xlu0 %139
    %v143 = vadd.f32 %v73, %v138
    %v144 = vadd.f32 %v74, %v140
    %s145 = sld [smem:[#allocation3 + $0x7]]
    %v146 = vstv %s145
    %v147 = vmul.f32 %v29, %v146
    %v148 = vmul.f32 %v30, %v146
    %151 = vrot.lane.b32.xlu0 %v147, 126
    %v152 = vpop.permute.xlu0 %151
    %153 = vrot.lane.b32.xlu0 %v148, 126
    %v154 = vpop.permute.xlu0 %153
    %v157 = vadd.f32 %v87, %v152
    %v158 = vadd.f32 %v88, %v154
    %s159 = sld [smem:[#allocation3 + $0xc]]
    %v160 = vstv %s159
    %v161 = vmul.f32 %v29, %v160
    %v162 = vmul.f32 %v30, %v160
    %165 = vrot.lane.b32.xlu0 %v161, 126
    %v166 = vpop.permute.xlu0 %165
    %167 = vrot.lane.b32.xlu0 %v162, 126
    %v168 = vpop.permute.xlu0 %167
    %v171 = vadd.f32 %v101, %v166
    %v172 = vadd.f32 %v102, %v168
    %s173 = sld [smem:[#allocation3 + $0x11]]
    %v174 = vstv %s173
    %v175 = vmul.f32 %v29, %v174
    %v176 = vmul.f32 %v30, %v174
    %179 = vrot.lane.b32.xlu0 %v175, 126
    %v180 = vpop.permute.xlu0 %179
    %181 = vrot.lane.b32.xlu0 %v176, 126
    %v182 = vpop.permute.xlu0 %181
    %v185 = vadd.f32 %v115, %v180
    %v186 = vadd.f32 %v116, %v182
    %s187 = sld [smem:[#allocation3 + $0x16]]
    %v188 = vstv %s187
    %v189 = vmul.f32 %v29, %v188
    %v190 = vmul.f32 %v30, %v188
    %193 = vrot.lane.b32.xlu0 %v189, 126
    %v194 = vpop.permute.xlu0 %193
    %195 = vrot.lane.b32.xlu0 %v190, 126
    %v196 = vpop.permute.xlu0 %195
    %v199 = vadd.f32 %v129, %v194
    %v200 = vadd.f32 %v130, %v196
    %s201 = sld [smem:[#allocation3 + $0x3]]
    %v202 = vstv %s201
    %v203 = vmul.f32 %v29, %v202
    %v204 = vmul.f32 %v30, %v202
    %207 = vrot.lane.b32.xlu0 %v203, 125
    %v208 = vpop.permute.xlu0 %207
    %209 = vrot.lane.b32.xlu0 %v204, 125
    %v210 = vpop.permute.xlu0 %209
    %v213 = vadd.f32 %v143, %v208
    %v214 = vadd.f32 %v144, %v210
    %s215 = sld [smem:[#allocation3 + $0x8]]
    %v216 = vstv %s215
    %v217 = vmul.f32 %v29, %v216
    %v218 = vmul.f32 %v30, %v216
    %221 = vrot.lane.b32.xlu0 %v217, 125
    %v222 = vpop.permute.xlu0 %221
    %223 = vrot.lane.b32.xlu0 %v218, 125
    %v224 = vpop.permute.xlu0 %223
    %v227 = vadd.f32 %v157, %v222
    %v228 = vadd.f32 %v158, %v224
    %s229 = sld [smem:[#allocation3 + $0xd]]
    %v230 = vstv %s229
    %v231 = vmul.f32 %v29, %v230
    %v232 = vmul.f32 %v30, %v230
    %235 = vrot.lane.b32.xlu0 %v231, 125
    %v236 = vpop.permute.xlu0 %235
    %237 = vrot.lane.b32.xlu0 %v232, 125
    %v238 = vpop.permute.xlu0 %237
    %v241 = vadd.f32 %v171, %v236
    %v242 = vadd.f32 %v172, %v238
    %s243 = sld [smem:[#allocation3 + $0x12]]
    %v244 = vstv %s243
    %v245 = vmul.f32 %v29, %v244
    %v246 = vmul.f32 %v30, %v244
    %249 = vrot.lane.b32.xlu0 %v245, 125
    %v250 = vpop.permute.xlu0 %249
    %251 = vrot.lane.b32.xlu0 %v246, 125
    %v252 = vpop.permute.xlu0 %251
    %v255 = vadd.f32 %v185, %v250
    %v256 = vadd.f32 %v186, %v252
    %s257 = sld [smem:[#allocation3 + $0x17]]
    %v258 = vstv %s257
    %v259 = vmul.f32 %v29, %v258
    %v260 = vmul.f32 %v30, %v258
    %263 = vrot.lane.b32.xlu0 %v259, 125
    %v264 = vpop.permute.xlu0 %263
    %265 = vrot.lane.b32.xlu0 %v260, 125
    %v266 = vpop.permute.xlu0 %265
    %v269 = vadd.f32 %v199, %v264
    %v270 = vadd.f32 %v200, %v266
    %s271 = sld [smem:[#allocation3 + $0x4]]
    %v272 = vstv %s271
    %v273 = vmul.f32 %v29, %v272
    %v274 = vmul.f32 %v30, %v272
    %277 = vrot.lane.b32.xlu0 %v273, 124
    %v278 = vpop.permute.xlu0 %277
    %279 = vrot.lane.b32.xlu0 %v274, 124
    %v280 = vpop.permute.xlu0 %279
    %v283 = vadd.f32 %v213, %v278
    %v284 = vadd.f32 %v214, %v280
    %s285 = sld [smem:[#allocation3 + $0x9]]
    %v286 = vstv %s285
    %v287 = vmul.f32 %v29, %v286
    %v288 = vmul.f32 %v30, %v286
    %291 = vrot.lane.b32.xlu0 %v287, 124
    %v292 = vpop.permute.xlu0 %291
    %293 = vrot.lane.b32.xlu0 %v288, 124
    %v294 = vpop.permute.xlu0 %293
    %v297 = vadd.f32 %v227, %v292
    %v298 = vadd.f32 %v228, %v294
    %s299 = sld [smem:[#allocation3 + $0xe]]
    %v300 = vstv %s299
    %v301 = vmul.f32 %v29, %v300
    %v302 = vmul.f32 %v30, %v300
    %305 = vrot.lane.b32.xlu0 %v301, 124
    %v306 = vpop.permute.xlu0 %305
    %307 = vrot.lane.b32.xlu0 %v302, 124
    %v308 = vpop.permute.xlu0 %307
    %v311 = vadd.f32 %v241, %v306
    %v312 = vadd.f32 %v242, %v308
    %s313 = sld [smem:[#allocation3 + $0x13]]
    %v314 = vstv %s313
    %v315 = vmul.f32 %v29, %v314
    %v316 = vmul.f32 %v30, %v314
    %319 = vrot.lane.b32.xlu0 %v315, 124
    %v320 = vpop.permute.xlu0 %319
    %321 = vrot.lane.b32.xlu0 %v316, 124
    %v322 = vpop.permute.xlu0 %321
    %v325 = vadd.f32 %v255, %v320
    %v326 = vadd.f32 %v256, %v322
    %s327 = sld [smem:[#allocation3 + $0x18]]
    %v328 = vstv %s327
    %v329 = vmul.f32 %v29, %v328
    %v330 = vmul.f32 %v30, %v328
    %333 = vrot.lane.b32.xlu0 %v329, 124
    %v334 = vpop.permute.xlu0 %333
    %335 = vrot.lane.b32.xlu0 %v330, 124
    %v336 = vpop.permute.xlu0 %335
    %v339 = vadd.f32 %v269, %v334
    %v340 = vadd.f32 %v270, %v336
    %v343 = vrot.slane %v297, 1
    %v344 = vrot.slane %v298, 1
    %v347 = vadd.f32 %v283, %v343
    %v348 = vadd.f32 %v284, %v344
    %v351 = vrot.slane %v325, 1
    %v352 = vrot.slane %v326, 1
    %v355 = vadd.f32 %v311, %v351
    %v356 = vadd.f32 %v312, %v352
    %v359 = vrot.slane %v355, 2
    %v360 = vrot.slane %v356, 2
    %v363 = vadd.f32 %v347, %v359
    %v364 = vadd.f32 %v348, %v360
    %v367 = vrot.slane %v339, 4
    %v368 = vrot.slane %v340, 4
    %v371 = vadd.f32 %v363, %v367
    %v372 = vadd.f32 %v364, %v368
    %s373 = sld [smem:[#allocation2]]
    %v374 = vstv %s373
    %v375 = vadd.f32 %v371, %v374
    %v376 = vadd.f32 %v372, %v374
    %v379 = vrot.slane %v376, 7
    %vm380 = vcmask 1041409
    %v381 = vsel %vm380, %v379, %v375
    %vm383 = vcmask 91136
    %384 = vst.msk [vmem:[#allocation6] sm:$0x3] %vm383, %v381
    // Predicated region
    $region18: #{tpu_custom_call.1} parent=1 // pred_check
      _
    $region19: #{tpu_custom_call.1} parent=1 // pred_check_branch
      %386 = sbr.rel (0) target = $region21
    $region20: #{tpu_custom_call.1} parent=1 // pred_region
      %s388 = ssub.s32 32, 32
      %389 = vsyncadd [#allocation4], %s388
      %s391 = sshll.u32 [#allocation6], 4
      %s392 = int_to_ptr.vmem [resolvable:$true] %s391
      %394 = dma.vmem_to_hbm [thread:$0]  %s392, 32, %s3, [#allocation4]
    $region21: #{tpu_custom_call.1} parent=1 // pred_fallthru
      _
    // Predicated region
    $region22: #{tpu_custom_call.1} parent=1 // pred_check
      _
    $region23: #{tpu_custom_call.1} parent=1 // pred_check_branch
      %396 = sbr.rel (0) target = $region25
    $region24: #{tpu_custom_call.1} parent=1 // pred_region
      %397 = dma.done [#allocation4], 32
    $region25: #{tpu_custom_call.1} parent=1 // pred_fallthru
      _
    %398 = vsyncpa [#allocation4], 1
    %399 = vsyncpa [#allocation5], 1

</llo_original>
